<compile_context>
chip_gen: v6e
topology: v6e:2x2x1
jax: 0.10.0
libtpu: 0.0.40
codegen_flags: <defaults>
</compile_context>

<pallas_src>
import functools
import math

import numpy as np
import jax
import jax.numpy as jnp
from jax import lax
from jax.experimental import pallas as pl
from jax.experimental.pallas import tpu as pltpu


def make_positional_encoding(seq_len: int, d_model: int, dtype=jnp.float32):
    """Matches the buffer built in PositionalEncoding.__init__ (shape (seq_len, d_model))."""
    pos = jnp.arange(seq_len, dtype=jnp.float32)[:, None]                     # (S, 1)
    denom = jnp.exp(jnp.arange(0, d_model, 2, dtype=jnp.float32)
                    * (-np.log(10000.0) / d_model))                           # (D/2,)
    pe = jnp.zeros((seq_len, d_model), jnp.float32)
    pe = pe.at[:, 0::2].set(jnp.sin(pos * denom))
    pe = pe.at[:, 1::2].set(jnp.cos(pos * denom))
    return pe.astype(dtype)


def _pe_dropout_kernel(x_ref, pe_ref, o_ref, *, n_pe, tile_r, tile_w, pr,
                       apply_dropout, keep_threshold, keep_scale, seed):
    # x_ref : (tile_r, tile_w)  slab of the flattened input
    # pe_ref: (pr,    tile_w)   matching slab of the flattened positional encoding
    #                           (pr == tile_r, pr == 1 broadcast row, or tiled tile_r//pr times)
    x = x_ref[...].astype(jnp.float32)       # compute in f32; cast once at the store
    pe = pe_ref[...].astype(jnp.float32)
    if pr == tile_r or pr == 1:
        y = x + pe                           # equal shapes or sublane-broadcast add
    else:
        y = x + jnp.tile(pe, (tile_r // pr, 1))

    if apply_dropout:
        # Stateless, tiling-independent dropout mask.  Row / column hashes are
        # computed on thin strips (cheap); only one u32 multiply + two
        # xor-shifts + compare/select run at full (tile_r, tile_w) width.
        wb = pl.program_id(0)
        pb = pl.program_id(1)
        bg = pl.program_id(2)
        row0 = ((bg * n_pe + pb) * tile_r).astype(jnp.uint32)
        col0 = (wb * tile_w).astype(jnp.uint32)

        r = lax.broadcasted_iota(jnp.uint32, (tile_r, 1), 0) + row0
        c = lax.broadcasted_iota(jnp.uint32, (1, tile_w), 1) + col0
        hr = (r ^ jnp.uint32(seed)) * jnp.uint32(0x9E3779B1)
        hr = (hr ^ (hr >> 15)) * jnp.uint32(0x85EBCA6B)
        hc = c * jnp.uint32(0xC2B2AE35)
        hc = hc ^ (hc >> 16)

        h = hr + hc                          # broadcast to full tile
        h = h ^ (h >> 15)
        h = h * jnp.uint32(0x7FEB352D)
        h = h ^ (h >> 13)

        keep = h >= jnp.uint32(keep_threshold)
        y = jnp.where(keep, y * jnp.float32(keep_scale), 0.0)

    o_ref[...] = y.astype(o_ref.dtype)


def _largest_mult8_divisor(n, cap):
    """Largest divisor of n that is a multiple of 8 and <= cap (n % 8 == 0)."""
    d = max(8, (min(n, cap) // 8) * 8)
    while d > 8:
        if n % d == 0:
            return d
        d -= 8
    return 8


def positional_encoding_forward(x, pe_full, *, dropout_p=0.0, training=False, seed=0):
    """x: (B, S, D); pe_full: (max_seq_len>=S, D). Returns (B, S, D), same dtype as x."""
    B, S, D = x.shape
    dtype = x.dtype
    isz = jnp.dtype(dtype).itemsize
    # No-ops when the caller passes a pre-sliced, dtype-matched pe (recommended).
    pe = pe_full[:S, :].astype(dtype)

    # ---- layout selection: lane-dense AND sublane-dense whenever possible ----
    g = 128 // math.gcd(D, 128)              # smallest g with (g*D) % 128 == 0
    if S % g == 0 and (S // g) % 8 == 0:
        Sg, W = S // g, g * D                # rows = groups of g sequence positions
        x2 = x.reshape(B * Sg, W)
        pe2 = pe.reshape(Sg, W)
    else:
        Sg, W = 1, S * D                     # fallback: rows = batch (small/odd shapes only)
        x2 = x.reshape(B, W)
        pe2 = pe.reshape(1, W)

    # ---- generation-aware tile budget ----------------------------------------
    try:
        vmem_cap = int(pltpu.get_tpu_info().vmem_capacity_bytes)
    except Exception:
        vmem_cap = 64 * 1024 * 1024          # conservative default (v7x per-TC)
    vmem_cap = max(vmem_cap, 32 * 1024 * 1024)
    tile_budget = min(vmem_cap * 3 // 8, 36 * 1024 * 1024)   # v7x ~24 MiB, v5e/v6e ~36 MiB
    # 2x double-buffered x-in + 2x out + 2x pe (all in x dtype) + headroom for u32/f32 temps.
    tile_elems_cap = max(8 * 128, tile_budget // (6 * isz + 8))
    vmem_limit = int(min(vmem_cap - 4 * 1024 * 1024, tile_budget + 16 * 1024 * 1024))

    # ---- tile shape -----------------------------------------------------------
    if W <= tile_elems_cap // 8:
        tile_w = W                                           # full width (multiple of 128 or full dim)
    else:
        tile_w = max(128, (tile_elems_cap // 8) // 128 * 128)
    rows_cap = max(8, tile_elems_cap // tile_w)

    if Sg <= rows_cap:
        # Cover k whole "batches" (pe periods) per tile.
        k = max(1, min(B, rows_cap // Sg))
        if k < B and (k * Sg) % 8 != 0:                      # only possible in fallback (Sg == 1)
            k = max(8, (k // 8) * 8)
        pr = Sg
        tile_r = k * Sg
        n_pe = 1
        n_bg = pl.cdiv(B, k)
    else:
        # Tile within one pe period; pr divides Sg so pe blocks never wrap.
        pr = _largest_mult8_divisor(Sg, rows_cap)
        tile_r = pr
        n_pe = Sg // pr
        n_bg = B
    n_w = pl.cdiv(W, tile_w)

    # Batch axis innermost and pe index_map independent of it -> each pe tile is
    # DMA'd from HBM exactly once and stays VMEM-resident across the batch loop.
    grid = (n_w, n_pe, n_bg)

    apply_dropout = bool(training) and float(dropout_p) > 0.0
    p = min(max(float(dropout_p), 0.0), 1.0 - 1e-7)
    keep_threshold = int(min(round(p * 2 ** 32), 2 ** 32 - 1))
    keep_scale = 1.0 / (1.0 - p)

    kernel = functools.partial(
        _pe_dropout_kernel,
        n_pe=n_pe, tile_r=tile_r, tile_w=tile_w, pr=pr,
        apply_dropout=apply_dropout, keep_threshold=keep_threshold,
        keep_scale=keep_scale, seed=int(seed) & 0xFFFFFFFF)

    out2 = pl.pallas_call(
        kernel,
        out_shape=jax.ShapeDtypeStruct(x2.shape, dtype),
        grid=grid,
        in_specs=[
            pl.BlockSpec((tile_r, tile_w), lambda wb, pb, bg, n=n_pe: (bg * n + pb, wb)),
            pl.BlockSpec((pr, tile_w), lambda wb, pb, bg: (pb, wb)),
        ],
        out_specs=pl.BlockSpec((tile_r, tile_w), lambda wb, pb, bg, n=n_pe: (bg * n + pb, wb)),
        compiler_params=pltpu.CompilerParams(
            dimension_semantics=("parallel", "parallel", "parallel"),
            vmem_limit_bytes=vmem_limit),
    )(x2, pe2)
    return out2.reshape(B, S, D)


if __name__ == "__main__":
    # Module hyper-params (deterministic, in-script)
    d_model = 32
    max_seq_len = 64
    dropout_p = 0.1

    key = jax.random.PRNGKey(0)
    # pe built once, dtype-matched (hoisted out of the per-call path).
    pe_full = make_positional_encoding(max_seq_len, d_model, dtype=jnp.float32)

    for (B, S) in [(2, 8), (2, 64)]:          # exercises fallback layout and row layout
        D = d_model
        kx = jax.random.fold_in(key, S)
        x = jax.random.normal(kx, (B, S, D), dtype=jnp.float32)
        ref = np.asarray(x) + np.asarray(pe_full)[None, :S, :]

        # Eval mode: dropout is identity -> exact semantics vs. plain-JAX reference.
        out_eval = positional_encoding_forward(x, pe_full, dropout_p=dropout_p, training=False)
        jax.block_until_ready(out_eval)
        np.testing.assert_allclose(np.asarray(out_eval), ref, rtol=1e-6, atol=1e-6)

        # Train mode: inverted dropout via the in-kernel counter-based hash PRNG.
        # TODO(synk): bit-exact reproduction of torch.nn.Dropout's RNG stream is not
        # possible; the mask has identical statistics but different bits.
        out_train = positional_encoding_forward(x, pe_full, dropout_p=dropout_p,
                                                training=True, seed=1234)
        jax.block_until_ready(out_train)
        assert out_train.shape == (B, S, D) and out_train.dtype == x.dtype
        scaled = ref / (1.0 - dropout_p)
        ot = np.asarray(out_train)
        assert np.all((ot == 0.0) | (np.abs(ot - scaled) < 1e-5))

    print("KERNEL_OK")
</pallas_src>

<mosaic_0001>
module attributes {stable_mosaic.version = 11 : i64} {
  func.func @_pe_dropout_kernel(%arg0: i32, %arg1: i32, %arg2: i32, %arg3: memref<2x256xf32, #tpu.memory_space<vmem>>, %arg4: memref<1x256xf32, #tpu.memory_space<vmem>>, %arg5: memref<2x256xf32, #tpu.memory_space<vmem>>) attributes {dimension_semantics = [#tpu.dimension_semantics<parallel>, #tpu.dimension_semantics<parallel>, #tpu.dimension_semantics<parallel>], iteration_bounds = array<i64: 1, 1, 1>, scalar_prefetch = 0 : i64, scratch_operands = 0 : i64, tpu.core_type = #tpu.core_type<tc>, window_params = [{transform_indices = @transform_0, window_bounds = array<i64: 2, 256>}, {transform_indices = @transform_1, window_bounds = array<i64: 1, 256>}, {transform_indices = @transform_2, window_bounds = array<i64: 2, 256>}]} {
    %c0 = arith.constant 0 : index
    %c0_0 = arith.constant 0 : index
    %0 = vector.load %arg3[%c0, %c0_0] : memref<2x256xf32, #tpu.memory_space<vmem>>, vector<2x256xf32>
    %c0_1 = arith.constant 0 : index
    %c0_2 = arith.constant 0 : index
    %1 = vector.load %arg4[%c0_1, %c0_2] : memref<1x256xf32, #tpu.memory_space<vmem>>, vector<1x256xf32>
    %2 = vector.broadcast %1 : vector<1x256xf32> to vector<2x256xf32>
    %3 = arith.addf %0, %2 : vector<2x256xf32>
    %c0_3 = arith.constant 0 : index
    %c0_4 = arith.constant 0 : index
    %4 = vector.load %arg5[%c0_3, %c0_4] : memref<2x256xf32, #tpu.memory_space<vmem>>, vector<2x256xf32>
    tpu.vector_store %arg5[%c0_3, %c0_4], %3 {strides = array<i32>} : memref<2x256xf32, #tpu.memory_space<vmem>>, vector<2x256xf32>,
    return
  }
  func.func @transform_0(%arg0: i32, %arg1: i32, %arg2: i32) -> (i32, i32) {
    %c1_i32 = arith.constant 1 : i32
    %0 = arith.muli %arg2, %c1_i32 : i32
    %1 = arith.addi %0, %arg1 : i32
    %c0_i32 = arith.constant 0 : i32
    return %1, %arg0 : i32, i32
  }
  func.func @transform_1(%arg0: i32, %arg1: i32, %arg2: i32) -> (i32, i32) {
    %c0_i32 = arith.constant 0 : i32
    return %arg1, %arg0 : i32, i32
  }
  func.func @transform_2(%arg0: i32, %arg1: i32, %arg2: i32) -> (i32, i32) {
    %c1_i32 = arith.constant 1 : i32
    %0 = arith.muli %arg2, %c1_i32 : i32
    %1 = arith.addi %0, %arg1 : i32
    %c0_i32 = arith.constant 0 : i32
    return %1, %arg0 : i32, i32
  }
}

</mosaic_0001>

<llo_original>
// kernel: tpu_custom_call.1
$region0: #{tpu_custom_call.1}
  #allocation0 [shape = 'u32[]', space=smem, size = 0x4, offset = 0x4, fixed_abs, tag = 'smem constant byte address 0x4 - core index']
  #allocation1 [shape = 'u32[144,128]{1,0:T(1,128)}', space=vmem, size = 0x12000, scoped, tag = 'internal scratch']
  %s0 = inlined_call_operand.hbm [shape: f32[2,256], index: 0, kind: input, shape index: {}]
  %s1 = inlined_call_operand.hbm [shape: f32[1,256], index: 1, kind: input, shape index: {}]
  %s2 = inlined_call_operand.hbm [shape: f32[2,256], index: 2, kind: output, shape index: {}]
  %s3 = sld [smem:[#allocation0]]
  $region26: #{tpu_custom_call.1} parent=0
    _
  %s5 = ssub.s32 1, %s3
  %s6 = scalar_select 0, %s5, %s3
  $region1: #{tpu_custom_call.1} parent=0
    #allocation2 [shape = 'u8[2048]{0}', space=vmem, size = 0x800, scoped, tag = 'input window, operand 0, single buffered']
    #allocation3 [shape = 's32[1]{0}', space=sflag, size = 0x4, scoped, tag = 'scoped memory for tpu_custom_call.1']
    #allocation4 [shape = 's32[1]{0}', space=sflag, size = 0x4, scoped, tag = 'scoped memory for tpu_custom_call.1']
    #allocation5 [shape = 'u8[1024]{0}', space=vmem, size = 0x400, scoped, tag = 'input window, operand 1, single buffered']
    #allocation6 [shape = 's32[1]{0}', space=sflag, size = 0x4, scoped, tag = 'scoped memory for tpu_custom_call.1']
    #allocation7 [shape = 'u8[2048]{0}', space=vmem, size = 0x800, scoped, tag = 'output window, operand 0, single buffered']
    %7 = vsyncpa [#allocation3], 0
    %8 = vsyncpa [#allocation6], 0
    %9 = vsyncpa [#allocation4], 0
    // Predicated region
    $region2: #{tpu_custom_call.1} parent=1 // pred_check
      _
    $region3: #{tpu_custom_call.1} parent=1 // pred_check_branch
      %11 = sbr.rel (0) target = $region5
    $region4: #{tpu_custom_call.1} parent=1 // pred_region
      %s12 = sadd.s32 0, 0
      %s14 = ssub.s32 64, 64
      %15 = vsyncadd [#allocation3], %s14
      %s16 = smul.addr %s12, 2
      %s17 = smul.addr %s16, 32
      %s18 = scalar_lea.hbm %s0, %s17
      %s20 = sshll.u32 [#allocation2], 4
      %s21 = int_to_ptr.vmem [resolvable:$true] %s20
      %23 = dma.hbm_to_vmem [thread:$0]  %s18, 64, %s21, [#allocation3]
    $region5: #{tpu_custom_call.1} parent=1 // pred_fallthru
      _
    // Predicated region
    $region6: #{tpu_custom_call.1} parent=1 // pred_check
      _
    $region7: #{tpu_custom_call.1} parent=1 // pred_check_branch
      %25 = sbr.rel (0) target = $region9
    $region8: #{tpu_custom_call.1} parent=1 // pred_region
      %s27 = ssub.s32 32, 32
      %28 = vsyncadd [#allocation6], %s27
      %s30 = sshll.u32 [#allocation5], 4
      %s31 = int_to_ptr.vmem [resolvable:$true] %s30
      %33 = dma.hbm_to_vmem [thread:$0]  %s1, 32, %s31, [#allocation6]
    $region9: #{tpu_custom_call.1} parent=1 // pred_fallthru
      _
    // Predicated region
    $region10: #{tpu_custom_call.1} parent=1 // pred_check
      _
    $region11: #{tpu_custom_call.1} parent=1 // pred_check_branch
      %35 = sbr.rel (0) target = $region13
    $region12: #{tpu_custom_call.1} parent=1 // pred_region
      %36 = dma.done [#allocation3], 64
    $region13: #{tpu_custom_call.1} parent=1 // pred_fallthru
      _
    // Predicated region
    $region14: #{tpu_custom_call.1} parent=1 // pred_check
      _
    $region15: #{tpu_custom_call.1} parent=1 // pred_check_branch
      %38 = sbr.rel (0) target = $region17
    $region16: #{tpu_custom_call.1} parent=1 // pred_region
      %39 = dma.done [#allocation6], 32
    $region17: #{tpu_custom_call.1} parent=1 // pred_fallthru
      _
    %s40 = sadd.s32 0, 0
    %s41 = sadd.s32 0, 0
    %v42 = vld [vmem:[#allocation2] sm:$0xf]
    %v43 = vld [vmem:[#allocation5] sm:$0x3]
    %v45 = vlaneseq
    %v46 = vshrl.u32 %v45, 7
    %v47 = vsub.s32 0, %v46
    %v48 = vrot.slane %v43, %v47
    %v49 = vlaneseq
    %v50 = vshrl.u32 %v49, 7
    %v51 = vsub.s32 1, %v50
    %v52 = vrot.slane %v43, %v51
    %v53 = vcombine.low %v48, %v52
    %v55 = vunpack.c.l.s4 1983009808
    %v56 = vunpack.c.0.s8 %v55
    %v57 = vlaneseq
    %v58 = vshrl.u32 %v57, 7
    %v59 = vsub.s32 %v56, %v58
    %v60 = vrot.slane %v53, %v59
    %v62 = vadd.f32 %v42, %v60
    %63 = vst [vmem:[#allocation7] sm:$0xf] %v62
    // Predicated region
    $region18: #{tpu_custom_call.1} parent=1 // pred_check
      _
    $region19: #{tpu_custom_call.1} parent=1 // pred_check_branch
      %65 = sbr.rel (0) target = $region21
    $region20: #{tpu_custom_call.1} parent=1 // pred_region
      %s66 = sadd.s32 0, 0
      %s68 = ssub.s32 64, 64
      %69 = vsyncadd [#allocation4], %s68
      %s70 = smul.addr %s66, 2
      %s71 = smul.addr %s70, 32
      %s72 = scalar_lea.hbm %s2, %s71
      %s74 = sshll.u32 [#allocation7], 4
      %s75 = int_to_ptr.vmem [resolvable:$true] %s74
      %77 = dma.vmem_to_hbm [thread:$0]  %s75, 64, %s72, [#allocation4]
    $region21: #{tpu_custom_call.1} parent=1 // pred_fallthru
      _
    // Predicated region
    $region22: #{tpu_custom_call.1} parent=1 // pred_check
      _
    $region23: #{tpu_custom_call.1} parent=1 // pred_check_branch
      %79 = sbr.rel (0) target = $region25
    $region24: #{tpu_custom_call.1} parent=1 // pred_region
      %80 = dma.done [#allocation4], 64
    $region25: #{tpu_custom_call.1} parent=1 // pred_fallthru
      _
    %81 = vsyncpa [#allocation3], 1
    %82 = vsyncpa [#allocation6], 1
    %83 = vsyncpa [#allocation4], 1

</llo_original>
